<compile_context>
chip_gen: v5e
topology: v5e:2x2
jax: 0.10.0
libtpu: 0.0.40
codegen_flags: <defaults>
</compile_context>

<pallas_src>
import numpy as np
import jax
import jax.numpy as jnp
from jax.experimental import pallas as pl
from jax.experimental.pallas import tpu as pltpu

HIDDEN = 64        # matches GNN(hidden_size=64) default
IN_FEATS = 1       # GCNConv(1, hidden)
NUM_CLASSES = 100  # nn.Linear(hidden, 100)
TREE_DEPTH = 4     # binary tree: 2**4 - 1 = 15 nodes

SUBLANE = 8        # f32 sublane tile
LANE = 128         # lane width
C_PAD = 128        # NUM_CLASSES padded to lane width

# Row layout of the packed small-operand tile ([8, 128] f32, one DMA total).
ROW_XT = 0    # x^T           (lanes [0, n_pad))
ROW_W1 = 1    # conv1 weight  (lanes [0, HIDDEN))
ROW_B1 = 2    # conv1 bias
ROW_B2 = 3    # conv2 bias
ROW_BFC = 4   # fc bias       (lanes [0, NUM_CLASSES), zero-padded to 128)


def _round_up(x, m):
    return (x + m - 1) // m * m


# ----------------------------- Pallas kernel -----------------------------
def gnn_kernel(adj_ref, packed_ref, w2_hbm, wfc_hbm, out_ref,
               w2_buf, wfc_buf, sem):
    # Kick off the two "large" weight DMAs immediately so they overlap the
    # VPU-only layer-1 work (default pipelining would finish them before the
    # body even starts, serializing ~24 KiB of weight traffic).
    cp_w2 = pltpu.make_async_copy(w2_hbm, w2_buf, sem.at[0])
    cp_wfc = pltpu.make_async_copy(wfc_hbm, wfc_buf, sem.at[1])
    cp_w2.start()
    cp_wfc.start()

    n_pad = adj_ref.shape[0]
    adj = adj_ref[...]                                      # [Np, Np] f32

    xt = packed_ref[ROW_XT:ROW_XT + 1, :n_pad]              # [1, Np]
    w1 = packed_ref[ROW_W1:ROW_W1 + 1, :HIDDEN]             # [1, H]
    b1 = packed_ref[ROW_B1:ROW_B1 + 1, :HIDDEN]             # [1, H]
    b2 = packed_ref[ROW_B2:ROW_B2 + 1, :HIDDEN]             # [1, H]
    bfc = packed_ref[ROW_BFC:ROW_BFC + 1, :]                # [1, C_PAD]

    # layer 1: GCNConv(1 -> H) folded via associativity  Â(X W1) = (Â X) W1.
    # Â X is a broadcast-mul + lane reduce (VPU/XLU) and (Â X) W1 is a rank-1
    # outer product (VPU) — no MXU, runs while the weight DMAs are in flight.
    ax = jnp.sum(adj * xt, axis=1, keepdims=True)           # [Np, 1]
    h1 = jnp.maximum(ax * w1 + b1, 0.0)                     # [Np, H] f32

    # layer 2: GCNConv(H -> H) -> relu.  bf16 MXU operands, f32 accumulation.
    cp_w2.wait()
    hw2 = jnp.dot(h1.astype(jnp.bfloat16), w2_buf[...],
                  preferred_element_type=jnp.float32)       # [Np, H]
    h2 = jnp.maximum(
        jnp.dot(adj.astype(jnp.bfloat16), hw2.astype(jnp.bfloat16),
                preferred_element_type=jnp.float32) + b2,
        0.0)                                                # [Np, H] f32

    # fc: Linear(H -> 128 padded)  (lane-dense output store).
    cp_wfc.wait()
    out_ref[...] = (jnp.dot(h2.astype(jnp.bfloat16), wfc_buf[...],
                            preferred_element_type=jnp.float32)
                    + bfc)


def _pallas_gnn(adj_p, small, w2_bf, wfc_bf):
    n_pad = adj_p.shape[0]
    flops = 2 * n_pad * HIDDEN * (HIDDEN + n_pad + C_PAD)
    bytes_accessed = (adj_p.size * 4 + small.size * 4
                      + w2_bf.size * 2 + wfc_bf.size * 2 + n_pad * C_PAD * 4)
    return pl.pallas_call(
        gnn_kernel,
        out_shape=jax.ShapeDtypeStruct((n_pad, C_PAD), jnp.float32),
        in_specs=[
            pl.BlockSpec(memory_space=pltpu.MemorySpace.VMEM),   # Â
            pl.BlockSpec(memory_space=pltpu.MemorySpace.VMEM),   # packed tile
            pl.BlockSpec(memory_space=pl.ANY),                   # w2 (HBM)
            pl.BlockSpec(memory_space=pl.ANY),                   # wfc (HBM)
        ],
        out_specs=pl.BlockSpec(memory_space=pltpu.MemorySpace.VMEM),
        scratch_shapes=[
            pltpu.VMEM((HIDDEN, HIDDEN), jnp.bfloat16),          # w2 buffer
            pltpu.VMEM((HIDDEN, C_PAD), jnp.bfloat16),           # wfc buffer
            pltpu.SemaphoreType.DMA((2,)),
        ],
        cost_estimate=pl.CostEstimate(
            flops=flops, transcendentals=0, bytes_accessed=bytes_accessed),
    )(adj_p, small, w2_bf, wfc_bf)


# ------------------------------- wrapper ---------------------------------
def prepack(adj_hat, params):
    """One-time padding/packing of the graph + static weights (kept out of
    the per-call path so they are not re-padded on every forward)."""
    w1, b1, w2, b2, wfc, bfc = params
    n = adj_hat.shape[0]
    n_pad = _round_up(n, SUBLANE)                            # 15 -> 16
    adj_p = jnp.zeros((n_pad, n_pad), jnp.float32).at[:n, :n].set(adj_hat)
    small = jnp.zeros((SUBLANE, LANE), jnp.float32)
    small = small.at[ROW_W1, :HIDDEN].set(w1.reshape(-1))
    small = small.at[ROW_B1, :HIDDEN].set(b1)
    small = small.at[ROW_B2, :HIDDEN].set(b2)
    small = small.at[ROW_BFC, :NUM_CLASSES].set(bfc)
    w2_bf = w2.astype(jnp.bfloat16)
    wfc_bf = (jnp.zeros((HIDDEN, C_PAD), jnp.float32)
              .at[:, :NUM_CLASSES].set(wfc).astype(jnp.bfloat16))
    return adj_p, small, w2_bf, wfc_bf


@jax.jit
def gnn_forward(adj_p, small_base, w2_bf, wfc_bf, x):
    """Single-dispatch forward: x insertion, pallas_call and output slice all
    live inside one jitted XLA program."""
    n = x.shape[0]
    small = small_base.at[ROW_XT, :n].set(x[:, 0])
    out = _pallas_gnn(adj_p, small, w2_bf, wfc_bf)
    return out[:n, :NUM_CLASSES]


# ------------------------------ graph glue -------------------------------
def binary_tree_edge_index(depth):
    """Undirected (bidirectional) parent<->child edges of a full binary tree."""
    n = 2 ** depth - 1
    edges = []
    for i in range(n):
        for c in (2 * i + 1, 2 * i + 2):
            if c < n:
                edges.append((i, c))
                edges.append((c, i))
    return np.asarray(edges, dtype=np.int32).T, n   # [2, E], N


def gcn_normalized_adj(edge_index, num_nodes):
    """Â = D^{-1/2}(A + I)D^{-1/2} with Â[i, j] != 0 iff edge j -> i (or i==j)."""
    A = np.zeros((num_nodes, num_nodes), dtype=np.float32)
    src, dst = edge_index
    A[dst, src] = 1.0
    A = A + np.eye(num_nodes, dtype=np.float32)        # add self loops
    deg = A.sum(axis=1)
    d_inv_sqrt = 1.0 / np.sqrt(deg)
    return (d_inv_sqrt[:, None] * A) * d_inv_sqrt[None, :]


def init_params(key):
    k1, k2, k3, k4, k5, k6 = jax.random.split(key, 6)
    w1 = jax.random.normal(k1, (IN_FEATS, HIDDEN), jnp.float32) * (1.0 / np.sqrt(IN_FEATS))
    b1 = jax.random.normal(k2, (HIDDEN,), jnp.float32) * 0.01
    w2 = jax.random.normal(k3, (HIDDEN, HIDDEN), jnp.float32) * (1.0 / np.sqrt(HIDDEN))
    b2 = jax.random.normal(k4, (HIDDEN,), jnp.float32) * 0.01
    wfc = jax.random.normal(k5, (HIDDEN, NUM_CLASSES), jnp.float32) * (1.0 / np.sqrt(HIDDEN))
    bfc = jax.random.normal(k6, (NUM_CLASSES,), jnp.float32) * 0.01
    return w1, b1, w2, b2, wfc, bfc


def reference_forward(adj_hat, x, params):
    w1, b1, w2, b2, wfc, bfc = params
    h1 = jnp.maximum(adj_hat @ (x @ w1) + b1, 0.0)
    h2 = jnp.maximum(adj_hat @ (h1 @ w2) + b2, 0.0)
    return h2 @ wfc + bfc


# --------------------------------- main -----------------------------------
if __name__ == "__main__":
    key = jax.random.PRNGKey(0)
    k_x, k_p = jax.random.split(key)

    edge_index, num_nodes = binary_tree_edge_index(TREE_DEPTH)   # [2, 28], N=15
    adj_hat = jnp.asarray(gcn_normalized_adj(edge_index, num_nodes))

    x = jax.random.normal(k_x, (num_nodes, IN_FEATS), jnp.float32)   # data.x
    params = init_params(k_p)

    adj_p, small_base, w2_bf, wfc_bf = prepack(adj_hat, params)      # one-time

    out = gnn_forward(adj_p, small_base, w2_bf, wfc_bf, x)
    out = jax.block_until_ready(out)

    # bf16 MXU operands (f32 accumulation) -> relaxed tolerance vs f32 ref.
    ref = reference_forward(adj_hat, x, params)
    np.testing.assert_allclose(np.asarray(out), np.asarray(ref),
                               rtol=5e-2, atol=5e-2)
    assert out.shape == (num_nodes, NUM_CLASSES)
    print("KERNEL_OK")
</pallas_src>

<mosaic_0001>
module attributes {stable_mosaic.version = 11 : i64} {
  func.func @gnn_kernel(%arg0: memref<16x16xf32, #tpu.memory_space<vmem>>, %arg1: memref<8x128xf32, #tpu.memory_space<vmem>>, %arg2: memref<64x64xbf16, #tpu.memory_space<any>>, %arg3: memref<64x128xbf16, #tpu.memory_space<any>>, %arg4: memref<16x128xf32, #tpu.memory_space<vmem>>, %arg5: memref<64x64xbf16, #tpu.memory_space<vmem>>, %arg6: memref<64x128xbf16, #tpu.memory_space<vmem>>, %arg7: memref<2x!tpu.dma_semaphore, #tpu.memory_space<semaphore_mem>>) attributes {dimension_semantics = [], scalar_prefetch = 0 : i64, scratch_operands = 3 : i64, tpu.core_type = #tpu.core_type<tc>} {
    %c0_i32 = arith.constant 0 : i32
    %0 = tpu.memref_slice %arg7[%c0_i32] : memref<2x!tpu.dma_semaphore, #tpu.memory_space<semaphore_mem>> -> memref<1x!tpu.dma_semaphore, #tpu.memory_space<semaphore_mem>>
    %1 = tpu.memref_squeeze %0 : memref<1x!tpu.dma_semaphore, #tpu.memory_space<semaphore_mem>> -> memref<!tpu.dma_semaphore, #tpu.memory_space<semaphore_mem>>
    tpu.enqueue_dma source(%arg2 : memref<64x64xbf16, #tpu.memory_space<any>>) target(%arg5 : memref<64x64xbf16, #tpu.memory_space<vmem>>) target_semaphore(%1 : memref<!tpu.dma_semaphore, #tpu.memory_space<semaphore_mem>>)
    %c1_i32 = arith.constant 1 : i32
    %2 = tpu.memref_slice %arg7[%c1_i32] : memref<2x!tpu.dma_semaphore, #tpu.memory_space<semaphore_mem>> -> memref<1x!tpu.dma_semaphore, #tpu.memory_space<semaphore_mem>>
    %3 = tpu.memref_squeeze %2 : memref<1x!tpu.dma_semaphore, #tpu.memory_space<semaphore_mem>> -> memref<!tpu.dma_semaphore, #tpu.memory_space<semaphore_mem>>
    tpu.enqueue_dma source(%arg3 : memref<64x128xbf16, #tpu.memory_space<any>>) target(%arg6 : memref<64x128xbf16, #tpu.memory_space<vmem>>) target_semaphore(%3 : memref<!tpu.dma_semaphore, #tpu.memory_space<semaphore_mem>>)
    %c0 = arith.constant 0 : index
    %c0_0 = arith.constant 0 : index
    %4 = vector.load %arg0[%c0, %c0_0] : memref<16x16xf32, #tpu.memory_space<vmem>>, vector<16x16xf32>
    %c0_1 = arith.constant 0 : index
    %c0_2 = arith.constant 0 : index
    %5 = vector.load %arg1[%c0_1, %c0_2] : memref<8x128xf32, #tpu.memory_space<vmem>>, vector<1x16xf32>
    %c1 = arith.constant 1 : index
    %c0_3 = arith.constant 0 : index
    %6 = vector.load %arg1[%c1, %c0_3] : memref<8x128xf32, #tpu.memory_space<vmem>>, vector<1x64xf32>
    %c2 = arith.constant 2 : index
    %c0_4 = arith.constant 0 : index
    %7 = vector.load %arg1[%c2, %c0_4] : memref<8x128xf32, #tpu.memory_space<vmem>>, vector<1x64xf32>
    %c3 = arith.constant 3 : index
    %c0_5 = arith.constant 0 : index
    %8 = vector.load %arg1[%c3, %c0_5] : memref<8x128xf32, #tpu.memory_space<vmem>>, vector<1x64xf32>
    %c4 = arith.constant 4 : index
    %c0_6 = arith.constant 0 : index
    %9 = vector.load %arg1[%c4, %c0_6] : memref<8x128xf32, #tpu.memory_space<vmem>>, vector<1x128xf32>
    %10 = vector.broadcast %5 : vector<1x16xf32> to vector<16x16xf32>
    %11 = arith.mulf %4, %10 : vector<16x16xf32>
    %cst = arith.constant dense<0.000000e+00> : vector<16xf32>
    %12 = vector.multi_reduction <add>, %11, %cst [1] : vector<16x16xf32> to vector<16xf32>
    %13 = vector.shape_cast %12 : vector<16xf32> to vector<16x1xf32>
    %14 = vector.broadcast %13 : vector<16x1xf32> to vector<16x64xf32>
    %15 = vector.broadcast %6 : vector<1x64xf32> to vector<16x64xf32>
    %16 = arith.mulf %14, %15 : vector<16x64xf32>
    %17 = vector.broadcast %7 : vector<1x64xf32> to vector<16x64xf32>
    %18 = arith.addf %16, %17 : vector<16x64xf32>
    %cst_7 = arith.constant 0.000000e+00 : f32
    %19 = vector.broadcast %cst_7 : f32 to vector<16x64xf32>
    %20 = arith.maximumf %18, %19 : vector<16x64xf32>
    %c0_i32_8 = arith.constant 0 : i32
    %21 = tpu.memref_slice %arg7[%c0_i32_8] : memref<2x!tpu.dma_semaphore, #tpu.memory_space<semaphore_mem>> -> memref<1x!tpu.dma_semaphore, #tpu.memory_space<semaphore_mem>>
    %22 = tpu.memref_squeeze %21 : memref<1x!tpu.dma_semaphore, #tpu.memory_space<semaphore_mem>> -> memref<!tpu.dma_semaphore, #tpu.memory_space<semaphore_mem>>
    tpu.wait_dma2 semaphore(%22 : memref<!tpu.dma_semaphore, #tpu.memory_space<semaphore_mem>>) src(%arg2 : memref<64x64xbf16, #tpu.memory_space<any>>) dst(%arg5 : memref<64x64xbf16, #tpu.memory_space<vmem>>)
    %23 = arith.truncf %20 : vector<16x64xf32> to vector<16x64xbf16>
    %c0_9 = arith.constant 0 : index
    %c0_10 = arith.constant 0 : index
    %24 = vector.load %arg5[%c0_9, %c0_10] : memref<64x64xbf16, #tpu.memory_space<vmem>>, vector<64x64xbf16>
    %cst_11 = arith.constant dense<0.000000e+00> : vector<16x64xf32>
    %25 = tpu.matmul %23, %24, %cst_11 {dimension_numbers = #tpu.dot_dimension_numbers<[1], [0], [0], [1], [0, 0, 1, 1], [], []>} : vector<16x64xbf16>, vector<64x64xbf16>, vector<16x64xf32> -> vector<16x64xf32>
    %26 = arith.truncf %4 : vector<16x16xf32> to vector<16x16xbf16>
    %27 = arith.truncf %25 : vector<16x64xf32> to vector<16x64xbf16>
    %cst_12 = arith.constant dense<0.000000e+00> : vector<16x64xf32>
    %28 = tpu.matmul %26, %27, %cst_12 {dimension_numbers = #tpu.dot_dimension_numbers<[1], [0], [0], [1], [0, 0, 1, 1], [], []>} : vector<16x16xbf16>, vector<16x64xbf16>, vector<16x64xf32> -> vector<16x64xf32>
    %29 = vector.broadcast %8 : vector<1x64xf32> to vector<16x64xf32>
    %30 = arith.addf %28, %29 : vector<16x64xf32>
    %cst_13 = arith.constant 0.000000e+00 : f32
    %31 = vector.broadcast %cst_13 : f32 to vector<16x64xf32>
    %32 = arith.maximumf %30, %31 : vector<16x64xf32>
    %c1_i32_14 = arith.constant 1 : i32
    %33 = tpu.memref_slice %arg7[%c1_i32_14] : memref<2x!tpu.dma_semaphore, #tpu.memory_space<semaphore_mem>> -> memref<1x!tpu.dma_semaphore, #tpu.memory_space<semaphore_mem>>
    %34 = tpu.memref_squeeze %33 : memref<1x!tpu.dma_semaphore, #tpu.memory_space<semaphore_mem>> -> memref<!tpu.dma_semaphore, #tpu.memory_space<semaphore_mem>>
    tpu.wait_dma2 semaphore(%34 : memref<!tpu.dma_semaphore, #tpu.memory_space<semaphore_mem>>) src(%arg3 : memref<64x128xbf16, #tpu.memory_space<any>>) dst(%arg6 : memref<64x128xbf16, #tpu.memory_space<vmem>>)
    %35 = arith.truncf %32 : vector<16x64xf32> to vector<16x64xbf16>
    %c0_15 = arith.constant 0 : index
    %c0_16 = arith.constant 0 : index
    %36 = vector.load %arg6[%c0_15, %c0_16] : memref<64x128xbf16, #tpu.memory_space<vmem>>, vector<64x128xbf16>
    %cst_17 = arith.constant dense<0.000000e+00> : vector<16x128xf32>
    %37 = tpu.matmul %35, %36, %cst_17 {dimension_numbers = #tpu.dot_dimension_numbers<[1], [0], [0], [1], [0, 0, 1, 1], [], []>} : vector<16x64xbf16>, vector<64x128xbf16>, vector<16x128xf32> -> vector<16x128xf32>
    %38 = vector.broadcast %9 : vector<1x128xf32> to vector<16x128xf32>
    %39 = arith.addf %37, %38 : vector<16x128xf32>
    %c0_18 = arith.constant 0 : index
    %c0_19 = arith.constant 0 : index
    %40 = vector.load %arg4[%c0_18, %c0_19] : memref<16x128xf32, #tpu.memory_space<vmem>>, vector<16x128xf32>
    tpu.vector_store %arg4[%c0_18, %c0_19], %39 {strides = array<i32>} : memref<16x128xf32, #tpu.memory_space<vmem>>, vector<16x128xf32>,
    return
  }
}

</mosaic_0001>

<llo_original>
// kernel: gnn_forward.1
$region0: #{gnn_forward.1}
  #allocation0 [shape = 'u32[]', space=smem, size = 0x4, offset = 0x4, fixed_abs, tag = 'smem constant byte address 0x4 - core index']
  #allocation1 [shape = 'u32[72,128]{1,0:T(1,128)}', space=vmem, size = 0x9000, scoped, tag = 'internal scratch']
  #allocation2 [shape = 'bf16[64,64]{1,0:T(8,128)(2,1)}', space=vmem, size = 0x4000, scoped, tag = 'scratch operand']
  #allocation3 [shape = 'bf16[64,128]{1,0:T(8,128)(2,1)}', space=vmem, size = 0x4000, scoped, tag = 'scratch operand']
  #allocation4 [shape = 's32[2]{0}', space=sflag, size = 0x8, scoped, tag = 'scratch operand']
  #allocation9 [shape = 's32[]', space=sflag, size = 0x4, offset = 0, fixed_abs, tag = 'sflag constant byte address 0x0 - dummy sync flag']
  #allocation10 [shape = 's32[]', space=sflag, size = 0x4, offset = 0, fixed_abs, tag = 'sflag constant byte address 0x0 - dummy sync flag']
  #allocation11 [shape = 'u32[]', space=smem, size = 0x4, offset = 0x44, fixed_abs, tag = 'smem constant byte address 0x44 - assertion arg 0']
  #allocation12 [shape = 'u32[]', space=smem, size = 0x4, offset = 0x48, fixed_abs, tag = 'smem constant byte address 0x48 - assertion arg 1']
  #allocation13 [shape = 's32[]', space=sflag, size = 0x4, offset = 0, fixed_abs, tag = 'sflag constant byte address 0x0 - dummy sync flag']
  #allocation14 [shape = 's32[]', space=sflag, size = 0x4, offset = 0, fixed_abs, tag = 'sflag constant byte address 0x0 - dummy sync flag']
  %s0 = inlined_call_operand.hbm [shape: f32[16,16], index: 0, kind: input, shape index: {}]
  %s1 = inlined_call_operand.vmem [shape: f32[8,128], index: 1, kind: input, shape index: {}]
  %s2 = inlined_call_operand.hbm [shape: bf16[64,64], index: 2, kind: input, shape index: {}]
  %s3 = inlined_call_operand.hbm [shape: bf16[64,128], index: 3, kind: input, shape index: {}]
  %s4 = inlined_call_operand.hbm [shape: f32[16,128], index: 4, kind: output, shape index: {}]
  %s5 = sld [smem:[#allocation0]]
  $region30: #{gnn_forward.1} parent=0
    _
  %s7 = ssub.s32 1, %s5
  %s8 = scalar_select 0, %s7, %s5
  $region1: #{gnn_forward.1} parent=0
    #allocation5 [shape = 'u8[8192]{0}', space=vmem, size = 0x2000, scoped, tag = 'input window, operand 0, single buffered']
    #allocation6 [shape = 's32[1]{0}', space=sflag, size = 0x4, scoped, tag = 'scoped memory for gnn_forward.1']
    #allocation7 [shape = 's32[1]{0}', space=sflag, size = 0x4, scoped, tag = 'scoped memory for gnn_forward.1']
    #allocation8 [shape = 'u8[8192]{0}', space=vmem, size = 0x2000, scoped, tag = 'output window, operand 0, single buffered']
    %9 = vsyncpa [#allocation6], 0
    %10 = vsyncpa [#allocation7], 0
    // Predicated region
    $region2: #{gnn_forward.1} parent=1 // pred_check
      _
    $region3: #{gnn_forward.1} parent=1 // pred_check_branch
      %12 = sbr.rel (0) target = $region5
    $region4: #{gnn_forward.1} parent=1 // pred_region
      %14 = vsyncadd [#allocation6], 0
      %s15 = sshll.u32 %s0, 4
      %s16 = int_to_ptr.hbm [resolvable:$true] %s15
      %s17 = sshll.u32 [#allocation5], 4
      %s18 = int_to_ptr.vmem [resolvable:$true] %s17
      %23 = dma.hbm_to_vmem [thread:$0]  %s16, 256, %s18, [#allocation6], 128, 128, 8
    $region5: #{gnn_forward.1} parent=1 // pred_fallthru
      _
    // Predicated region
    $region6: #{gnn_forward.1} parent=1 // pred_check
      _
    $region7: #{gnn_forward.1} parent=1 // pred_check_branch
      %25 = sbr.rel (0) target = $region9
    $region8: #{gnn_forward.1} parent=1 // pred_region
      _
    $region9: #{gnn_forward.1} parent=1 // pred_fallthru
      _
    // Predicated region
    $region10: #{gnn_forward.1} parent=1 // pred_check
      _
    $region11: #{gnn_forward.1} parent=1 // pred_check_branch
      %27 = sbr.rel (0) target = $region13
    $region12: #{gnn_forward.1} parent=1 // pred_region
      %29 = dma.done [#allocation6], 256
    $region13: #{gnn_forward.1} parent=1 // pred_fallthru
      _
    // Predicated region
    $region14: #{gnn_forward.1} parent=1 // pred_check
      _
    $region15: #{gnn_forward.1} parent=1 // pred_check_branch
      %32 = sbr.rel target = $region17
    $region16: #{gnn_forward.1} parent=1 // pred_region
      %33 = sst [smem:[#allocation11]] [#allocation10]
      %34 = sst [smem:[#allocation12]] [#allocation9]
    $region17: #{gnn_forward.1} parent=1 // pred_fallthru
      _
    %36 = shalt.err (0)
    %s38 = sshll.u32 %s2, 4
    %s39 = int_to_ptr.hbm [resolvable:$true] %s38
    %s40 = sshll.u32 [#allocation2], 4
    %s41 = int_to_ptr.vmem [resolvable:$true] %s40
    %43 = dma.hbm_to_vmem [thread:$0]  %s39, 512, %s41, [#allocation4]
    %s44 = scalar_lea.sflag [#allocation4], 1
    // Predicated region
    $region18: #{gnn_forward.1} parent=1 // pred_check
      _
    $region19: #{gnn_forward.1} parent=1 // pred_check_branch
      %46 = sbr.rel target = $region21
    $region20: #{gnn_forward.1} parent=1 // pred_region
      %47 = sst [smem:[#allocation11]] [#allocation14]
      %48 = sst [smem:[#allocation12]] [#allocation13]
    $region21: #{gnn_forward.1} parent=1 // pred_fallthru
      _
    %50 = shalt.err (0)
    %s52 = sshll.u32 %s3, 4
    %s53 = int_to_ptr.hbm [resolvable:$true] %s52
    %s54 = sshll.u32 [#allocation3], 4
    %s55 = int_to_ptr.vmem [resolvable:$true] %s54
    %57 = dma.hbm_to_vmem [thread:$0]  %s53, 512, %s55, %s44
    %v58 = vld [vmem:[#allocation5] sm:$0xff]
    %v59 = vld [vmem:[#allocation5 + $0x8] sm:$0xff]
    %v60 = vld [vmem:[%s1] sm:$0x1]
    %v61 = vld [vmem:[%s1 + $0x1] sm:$0x1]
    %v62 = vld [vmem:[%s1 + $0x2] sm:$0x1]
    %v63 = vld [vmem:[%s1 + $0x3] sm:$0x1]
    %v64 = vld [vmem:[%s1 + $0x4] sm:$0x1]
    %v65 = vperm.slane %v60, 0
    %v66 = vmul.f32 %v58, %v65
    %v67 = vmul.f32 %v59, %v65
    %vm68 = vcmask 130048
    %v69 = vsel %vm68, %v66, 0.0
    %70 = vadd.xlane.f32.xlu0 %v69
    %v71 = vpop.xlane.xlu0 %70
    %v72 = vsel %vm68, %v67, 0.0
    %73 = vadd.xlane.f32.xlu0 %v72
    %v74 = vpop.xlane.xlu0 %73
    %v75 = vperm.slane %v61, 0
    %v76 = vmul.f32 %v71, %v75
    %v77 = vmul.f32 %v74, %v75
    %v78 = vperm.slane %v62, 0
    %v79 = vadd.f32 %v76, %v78
    %v80 = vadd.f32 %v77, %v78
    %v81 = vmax.f32 %v79, 0.0
    %v82 = vmax.f32 %v80, 0.0
    %s83 = smul.u32 4, 8
    %s84 = smul.u32 %s83, 1
    %s85 = sshll.u32 %s84, 4
    %86 = dma.done [#allocation4], %s85
    %v87 = vpack.c.bf16 %v82, %v81
    %v88 = vld [vmem:[#allocation2] sm:$0xf]
    %v89 = vld [vmem:[#allocation2 + $0x4] sm:$0xf]
    %v90 = vld [vmem:[#allocation2 + $0x8] sm:$0xf]
    %v91 = vld [vmem:[#allocation2 + $0xc] sm:$0xf]
    %v92 = vld [vmem:[#allocation2 + $0x10] sm:$0xf]
    %v93 = vld [vmem:[#allocation2 + $0x14] sm:$0xf]
    %v94 = vld [vmem:[#allocation2 + $0x18] sm:$0xf]
    %v95 = vld [vmem:[#allocation2 + $0x1c] sm:$0xf]
    %v104 = vunpack.c.l.b16 %v88
    %v105 = vunpack.c.l.b16 %v89
    %v106 = vunpack.c.l.b16 %v90
    %v107 = vunpack.c.l.b16 %v91
    %v108 = vunpack.c.l.b16 %v92
    %v109 = vunpack.c.l.b16 %v93
    %v110 = vunpack.c.l.b16 %v94
    %v111 = vunpack.c.l.b16 %v95
    %v112 = vpack.c.b16 %v105, %v104
    %v113 = vpack.c.b16 %v107, %v106
    %v114 = vpack.c.b16 %v109, %v108
    %v115 = vpack.c.b16 %v111, %v110
    %vm120 = vcmask 523264
    %v122 = vsel %vm120, %v87, 0
    %124 = vmatpush.bf16.msra.mxu0 0
    %125 = vmatpush.bf16.msra.mxu0 0
    %126 = vmatpush.bf16.msra.mxu0 0
    %127 = vmatpush.bf16.msra.mxu0 0
    %128 = vmatpush.bf16.msra.mxu0 %v115
    %129 = vmatpush.bf16.msra.mxu0 %v114
    %130 = vmatpush.bf16.msra.mxu0 %v113
    %131 = vmatpush.bf16.msra.mxu0 %v112
    %132 = vmatmul.bf16.gmra.mxu0 %v122
    %v133 = vpop.f32.mrf.mxu0
    %v134 = vadd.f32 0.0, %v133
    %v135 = vpop.f32.mrf.mxu0
    %v136 = vadd.f32 0.0, %v135
    %137 = vdwg.mxu0
    %v138 = vpack.c.bf16 %v59, %v58
    %v139 = vpack.c.bf16 %v136, %v134
    %v140 = vperm.slane %v63, 0
    %v142 = vsel %vm68, %v138, 0
    %144 = vmatpush.bf16.msra.mxu0 0
    %145 = vmatpush.bf16.msra.mxu0 0
    %146 = vmatpush.bf16.msra.mxu0 0
    %147 = vmatpush.bf16.msra.mxu0 0
    %148 = vmatpush.bf16.msra.mxu0 0
    %149 = vmatpush.bf16.msra.mxu0 0
    %150 = vmatpush.bf16.msra.mxu0 0
    %151 = vmatpush.bf16.msra.mxu0 %v139
    %152 = vmatmul.bf16.gmra.mxu0 %v142
    %v153 = vpop.f32.mrf.mxu0
    %v154 = vadd.f32 %v140, %v153
    %v155 = vpop.f32.mrf.mxu0
    %v156 = vadd.f32 %v140, %v155
    %157 = vdwg.mxu0
    %v158 = vmax.f32 %v154, 0.0
    %v159 = vmax.f32 %v156, 0.0
    %s160 = sshll.u32 %s84, 4
    %161 = dma.done %s44, %s160
    %v162 = vpack.c.bf16 %v159, %v158
    %v163 = vld [vmem:[#allocation3] sm:$0xf]
    %v164 = vld [vmem:[#allocation3 + $0x4] sm:$0xf]
    %v165 = vld [vmem:[#allocation3 + $0x8] sm:$0xf]
    %v166 = vld [vmem:[#allocation3 + $0xc] sm:$0xf]
    %v167 = vld [vmem:[#allocation3 + $0x10] sm:$0xf]
    %v168 = vld [vmem:[#allocation3 + $0x14] sm:$0xf]
    %v169 = vld [vmem:[#allocation3 + $0x18] sm:$0xf]
    %v170 = vld [vmem:[#allocation3 + $0x1c] sm:$0xf]
    %v171 = vperm.slane %v64, 0
    %v180 = vunpack.c.l.b16 %v163
    %v181 = vunpack.c.l.b16 %v164
    %v182 = vunpack.c.l.b16 %v165
    %v183 = vunpack.c.l.b16 %v166
    %v184 = vunpack.c.l.b16 %v167
    %v185 = vunpack.c.l.b16 %v168
    %v186 = vunpack.c.l.b16 %v169
    %v187 = vunpack.c.l.b16 %v170
    %v188 = vpack.c.b16 %v181, %v180
    %v189 = vpack.c.b16 %v183, %v182
    %v190 = vpack.c.b16 %v185, %v184
    %v191 = vpack.c.b16 %v187, %v186
    %v197 = vsel %vm120, %v162, 0
    %199 = vmatpush.bf16.msra.mxu0 0
    %200 = vmatpush.bf16.msra.mxu0 0
    %201 = vmatpush.bf16.msra.mxu0 0
    %202 = vmatpush.bf16.msra.mxu0 0
    %203 = vmatpush.bf16.msra.mxu0 %v191
    %204 = vmatpush.bf16.msra.mxu0 %v190
    %205 = vmatpush.bf16.msra.mxu0 %v189
    %206 = vmatpush.bf16.msra.mxu0 %v188
    %207 = vmatmul.bf16.gmra.mxu0 %v197
    %v208 = vpop.f32.mrf.mxu0
    %v209 = vadd.f32 %v171, %v208
    %v210 = vpop.f32.mrf.mxu0
    %v211 = vadd.f32 %v171, %v210
    %212 = vdwg.mxu0
    %213 = vst [vmem:[#allocation8] sm:$0xff] %v209
    %214 = vst [vmem:[#allocation8 + $0x8] sm:$0xff] %v211
    // Predicated region
    $region22: #{gnn_forward.1} parent=1 // pred_check
      _
    $region23: #{gnn_forward.1} parent=1 // pred_check_branch
      %216 = sbr.rel (0) target = $region25
    $region24: #{gnn_forward.1} parent=1 // pred_region
      %218 = vsyncadd [#allocation7], 0
      %s219 = sshll.u32 [#allocation8], 4
      %s220 = int_to_ptr.vmem [resolvable:$true] %s219
      %s221 = sshll.u32 %s4, 4
      %s222 = int_to_ptr.hbm [resolvable:$true] %s221
      %227 = dma.vmem_to_hbm [thread:$0]  %s220, 256, %s222, [#allocation7], 128, 128, 8
    $region25: #{gnn_forward.1} parent=1 // pred_fallthru
      _
    // Predicated region
    $region26: #{gnn_forward.1} parent=1 // pred_check
      _
    $region27: #{gnn_forward.1} parent=1 // pred_check_branch
      %229 = sbr.rel (0) target = $region29
    $region28: #{gnn_forward.1} parent=1 // pred_region
      %231 = dma.done [#allocation7], 256
    $region29: #{gnn_forward.1} parent=1 // pred_fallthru
      _
    %232 = vsyncpa [#allocation6], 1
    %233 = vsyncpa [#allocation7], 1
  %234 = vsyncmov [#allocation4]
  %s235 = vpop.sfrf %234
  %p236 = scmp.eq.s32.totalorder %s235, 0
  %p237 = pneg %p236
  %239 = shalt.err (%p237)
  %s240 = scalar_lea.sflag [#allocation4], 1
  %241 = vsyncmov %s240
  %s242 = vpop.sfrf %241
  %p243 = scmp.eq.s32.totalorder %s242, 0
  %p244 = pneg %p243
  %246 = shalt.err (%p244)

</llo_original>
